<compile_context>
chip_gen: v7x
topology: tpu7x:2x2x1
jax: 0.10.0
libtpu: 0.0.40
codegen_flags: <defaults>
</compile_context>

<pallas_src>
import jax
import jax.numpy as jnp
from jax.experimental import pallas as pl
from jax.experimental.pallas import tpu as pltpu


def _round_up(x, m):
    return (x + m - 1) // m * m


def _ce_diag_kernel(scores_ref, loss_ref):
    """Per-row CE loss with label == global row index.

    scores_ref : (TM, C) tile of the (N_pad, C) scores (any float dtype).
    loss_ref   : (TM, 1) float32 per-row losses: logsumexp(row) - row[row_id].
    """
    tm, c = scores_ref.shape
    row_off = pl.program_id(0) * tm

    s = scores_ref[...].astype(jnp.float32)                       # (TM, C)

    # Numerically-stable logsumexp pieces.
    row_max = jnp.max(s, axis=-1, keepdims=True)                  # (TM, 1)
    shifted = s - row_max                                         # (TM, C)
    sum_exp = jnp.sum(jnp.exp(shifted), axis=-1, keepdims=True)   # (TM, 1)

    # Diagonal (label == global row index), taken from `shifted` so row_max
    # cancels:  lse - diag == log(sum_exp) - (diag - row_max).
    col_idx = jax.lax.broadcasted_iota(jnp.int32, (tm, c), 1)        # lane iota
    row_ids = row_off + jax.lax.broadcasted_iota(jnp.int32, (tm, 1), 0)
    diag_shifted = jnp.sum(jnp.where(col_idx == row_ids, shifted, 0.0),
                           axis=-1, keepdims=True)                # (TM, 1)

    loss_ref[...] = jnp.log(sum_exp) - diag_shifted


def cross_entropy_diag_loss(scores, *, tm=None):
    """Pallas TPU implementation of LossModule.forward."""
    n, c = scores.shape
    if n > c:
        raise ValueError(
            f"Diagonal labels (arange(N)) require N <= C, got N={n}, C={c}.")

    # Sublane alignment of the row tile depends on input dtype packing:
    # 8 rows (f32), 16 rows (bf16/f16), 32 rows (int8/fp8).
    itemsize = jnp.dtype(scores.dtype).itemsize
    sub = max(8, 32 // max(1, itemsize))

    if tm is None:
        # TM=256 keeps 2 double-buffered (TM, C) f32 inputs at ~16 MiB for
        # C=8192 — safely under the scoped-VMEM default on v5e/v6e/v7x while
        # amortizing the ~0.35us per-grid-step overhead.
        tm = min(256, _round_up(n, sub))
    tm = _round_up(tm, sub)

    n_pad = _round_up(n, tm)
    if n_pad != n:
        # Zero-padded rows are computed but sliced off before the mean.
        scores = jnp.pad(scores, ((0, n_pad - n), (0, 0)))

    grid = (n_pad // tm,)
    per_row = pl.pallas_call(
        _ce_diag_kernel,
        out_shape=jax.ShapeDtypeStruct((n_pad, 1), jnp.float32),
        grid=grid,
        in_specs=[pl.BlockSpec((tm, c), lambda i: (i, 0))],
        out_specs=pl.BlockSpec((tm, 1), lambda i: (i, 0)),
        compiler_params=pltpu.CompilerParams(
            dimension_semantics=("parallel",)),
    )(scores)

    # Tiny final reduction in XLA (free next to the N*C HBM pass).
    return jnp.sum(per_row[:n, 0]) / jnp.float32(n)


def _reference_loss(scores):
    # Pure-JAX reference (matches F.cross_entropy with arange labels, mean).
    s = scores.astype(jnp.float32)
    lse = jax.nn.logsumexp(s, axis=-1)
    diag = jnp.diagonal(s)
    return jnp.mean(lse - diag)


if __name__ == "__main__":
    key = jax.random.PRNGKey(0)
    k1, k2 = jax.random.split(key)

    # Case 1: small contrastive batch (single row tile), f32.
    scores1 = jax.random.normal(k1, (8, 16), dtype=jnp.float32)
    loss1 = jax.block_until_ready(cross_entropy_diag_loss(scores1))
    ref1 = _reference_loss(scores1)
    assert jnp.allclose(loss1, ref1, atol=1e-5, rtol=1e-5), (loss1, ref1)

    # Case 2: multi-tile grid with row padding (N=20 -> 3 tiles of 8) and a
    # lane-dense C (multiple of 128); exercises the per-tile diagonal offset.
    scores2 = jax.random.normal(k2, (20, 128), dtype=jnp.float32)
    loss2 = jax.block_until_ready(cross_entropy_diag_loss(scores2, tm=8))
    ref2 = _reference_loss(scores2)
    assert jnp.allclose(loss2, ref2, atol=1e-5, rtol=1e-5), (loss2, ref2)

    # Case 3: bf16 scores stay bf16 in HBM (half the bytes read); the kernel
    # upcasts to f32 internally.
    scores3 = scores2.astype(jnp.bfloat16)
    loss3 = jax.block_until_ready(cross_entropy_diag_loss(scores3))
    ref3 = _reference_loss(scores3)
    assert jnp.allclose(loss3, ref3, atol=1e-2, rtol=1e-2), (loss3, ref3)

    print("KERNEL_OK")
</pallas_src>

<mosaic_0001>
module attributes {stable_mosaic.version = 11 : i64} {
  func.func @_ce_diag_kernel(%arg0: i32, %arg1: memref<8x16xf32, #tpu.memory_space<vmem>>, %arg2: memref<8x1xf32, #tpu.memory_space<vmem>>) attributes {dimension_semantics = [#tpu.dimension_semantics<parallel>], iteration_bounds = array<i64: 1>, scalar_prefetch = 0 : i64, scratch_operands = 0 : i64, tpu.core_type = #tpu.core_type<tc>, window_params = [{transform_indices = @transform_0, window_bounds = array<i64: 8, 16>}, {transform_indices = @transform_1, window_bounds = array<i64: 8, 1>}]} {
    %c8_i32 = arith.constant 8 : i32
    %0 = arith.muli %arg0, %c8_i32 : i32
    %c0 = arith.constant 0 : index
    %c0_0 = arith.constant 0 : index
    %1 = vector.load %arg1[%c0, %c0_0] : memref<8x16xf32, #tpu.memory_space<vmem>>, vector<8x16xf32>
    %cst = arith.constant dense<0xFF800000> : vector<8xf32>
    %2 = vector.multi_reduction <maximumf>, %1, %cst [1] : vector<8x16xf32> to vector<8xf32>
    %3 = vector.shape_cast %2 : vector<8xf32> to vector<8x1xf32>
    %4 = vector.broadcast %3 : vector<8x1xf32> to vector<8x16xf32>
    %5 = arith.subf %1, %4 : vector<8x16xf32>
    %6 = math.exp %5 : vector<8x16xf32>
    %cst_1 = arith.constant dense<0.000000e+00> : vector<8xf32>
    %7 = vector.multi_reduction <add>, %6, %cst_1 [1] : vector<8x16xf32> to vector<8xf32>
    %8 = vector.shape_cast %7 : vector<8xf32> to vector<8x1xf32>
    %9 = tpu.iota {dimensions = array<i32: 1>} : vector<8x16xi32>
    %10 = tpu.iota {dimensions = array<i32: 0>} : vector<8x1xi32>
    %11 = vector.broadcast %0 : i32 to vector<8x1xi32>
    %12 = arith.addi %11, %10 : vector<8x1xi32>
    %13 = vector.broadcast %12 : vector<8x1xi32> to vector<8x16xi32>
    %14 = arith.cmpi eq, %9, %13 : vector<8x16xi32>
    %cst_2 = arith.constant 0.000000e+00 : f32
    %15 = vector.broadcast %cst_2 : f32 to vector<8x16xf32>
    %16 = arith.select %14, %5, %15 : vector<8x16xi1>, vector<8x16xf32>
    %cst_3 = arith.constant dense<0.000000e+00> : vector<8xf32>
    %17 = vector.multi_reduction <add>, %16, %cst_3 [1] : vector<8x16xf32> to vector<8xf32>
    %18 = vector.shape_cast %17 : vector<8xf32> to vector<8x1xf32>
    %19 = math.log %8 : vector<8x1xf32>
    %20 = arith.subf %19, %18 : vector<8x1xf32>
    %c0_4 = arith.constant 0 : index
    %c0_5 = arith.constant 0 : index
    %21 = vector.load %arg2[%c0_4, %c0_5] : memref<8x1xf32, #tpu.memory_space<vmem>>, vector<8x1xf32>
    tpu.vector_store %arg2[%c0_4, %c0_5], %20 {strides = array<i32>} : memref<8x1xf32, #tpu.memory_space<vmem>>, vector<8x1xf32>,
    return
  }
  func.func @transform_0(%arg0: i32) -> (i32, i32) {
    %c0_i32 = arith.constant 0 : i32
    %c0_i32_0 = arith.constant 0 : i32
    return %arg0, %c0_i32 : i32, i32
  }
  func.func @transform_1(%arg0: i32) -> (i32, i32) {
    %c0_i32 = arith.constant 0 : i32
    %c0_i32_0 = arith.constant 0 : i32
    return %arg0, %c0_i32 : i32, i32
  }
}

</mosaic_0001>

<llo_original>
// kernel: tpu_custom_call.1
$region0: #{tpu_custom_call.1}
  #allocation0 [shape = 'u32[]', space=smem, size = 0x4, offset = 0x4, fixed_abs, tag = 'smem constant byte address 0x4 - core index']
  #allocation1 [shape = 'u32[144,128]{1,0:T(1,128)}', space=vmem, size = 0x12000, scoped, tag = 'internal scratch']
  %s0 = inlined_call_operand.hbm [shape: f32[8,16], index: 0, kind: input, shape index: {}]
  %s1 = inlined_call_operand.vmem [shape: f32[8,1], index: 1, kind: output, shape index: {}]
  %s2 = sld [smem:[#allocation0]]
  $region18: #{tpu_custom_call.1} parent=0
    _
  %s4 = ssub.s32 1, %s2
  %s5 = scalar_select 0, %s4, %s2
  $region1: #{tpu_custom_call.1} parent=0
    #allocation2 [shape = 'u8[4096]{0}', space=vmem, size = 0x1000, scoped, tag = 'input window, operand 0, single buffered']
    #allocation3 [shape = 's32[1]{0}', space=sflag, size = 0x4, scoped, tag = 'scoped memory for tpu_custom_call.1']
    %6 = vsyncpa [#allocation3], 0
    // Predicated region
    $region2: #{tpu_custom_call.1} parent=1 // pred_check
      _
    $region3: #{tpu_custom_call.1} parent=1 // pred_check_branch
      %8 = sbr.rel (0) target = $region5
    $region4: #{tpu_custom_call.1} parent=1 // pred_region
      %s10 = ssub.s32 128, 128
      %11 = vsyncadd [#allocation3], %s10
      %s13 = sshll.u32 [#allocation2], 4
      %s14 = int_to_ptr.vmem [resolvable:$true] %s13
      %16 = dma.hbm_to_vmem [thread:$0]  %s0, 128, %s14, [#allocation3]
    $region5: #{tpu_custom_call.1} parent=1 // pred_fallthru
      _
    // Predicated region
    $region6: #{tpu_custom_call.1} parent=1 // pred_check
      _
    $region7: #{tpu_custom_call.1} parent=1 // pred_check_branch
      %18 = sbr.rel (0) target = $region9
    $region8: #{tpu_custom_call.1} parent=1 // pred_region
      %19 = dma.done [#allocation3], 128
    $region9: #{tpu_custom_call.1} parent=1 // pred_fallthru
      _
    %s20 = smul.u32 0, 8
    %v21 = vld [vmem:[#allocation2] sm:$0xff]
    %vm22 = vcmask 130048
    %v23 = vsel %vm22, %v21, -inf
    %24 = vmax.xlane.f32.xlu0 %v23
    %v25 = vpop.xlane.xlu0 %24
    %v26 = vsub.f32 %v21, %v25
    %v27 = vmul.f32 %v26, 1.442695
    %v28 = vpow.pop %v27
    %v29 = vsel %vm22, %v28, 0.0
    %30 = vadd.xlane.f32.xlu0 %v29
    %v31 = vpop.xlane.xlu0 %30
    %v32 = vlaneseq
    %v33 = vand.u32 %v32, 127
    %v34 = vlaneseq
    %v35 = vshrl.u32 %v34, 7
    %v36 = vstv %s20
    %v37 = vadd.s32 %v36, %v35
    %vm38 = vcmp.eq.s32.totalorder %v33, %v37
    %v39 = vsel %vm38, %v26, 0.0
    %v40 = vsel %vm22, %v39, 0.0
    %41 = vadd.xlane.f32.xlu0 %v40
    %v42 = vpop.xlane.xlu0 %41
    %v43 = vlog2.pop %v31
    %v44 = vmul.f32 %v43, 0.6931472
    %v45 = vsub.f32 %v44, %v42
    %vm46 = vcmask 7168
    %47 = vst.msk [vmem:[%s1] sm:$0xff] %vm46, %v45
    // Predicated region
    $region10: #{tpu_custom_call.1} parent=1 // pred_check
      _
    $region11: #{tpu_custom_call.1} parent=1 // pred_check_branch
      %49 = sbr.rel (0) target = $region13
    $region12: #{tpu_custom_call.1} parent=1 // pred_region
      _
    $region13: #{tpu_custom_call.1} parent=1 // pred_fallthru
      _
    // Predicated region
    $region14: #{tpu_custom_call.1} parent=1 // pred_check
      _
    $region15: #{tpu_custom_call.1} parent=1 // pred_check_branch
      %51 = sbr.rel (0) target = $region17
    $region16: #{tpu_custom_call.1} parent=1 // pred_region
      _
    $region17: #{tpu_custom_call.1} parent=1 // pred_fallthru
      _
    %52 = vsyncpa [#allocation3], 1

</llo_original>
